<compile_context>
chip_gen: v7x
topology: tpu7x:2x2x1
jax: 0.10.0
libtpu: 0.0.40
codegen_flags: <defaults>
</compile_context>

<pallas_src>
import jax
import jax.numpy as jnp
from jax.experimental import pallas as pl
from jax.experimental.pallas import tpu as pltpu

NB_ITEM = 128       # nb_item (lane-aligned)
HIDDEN = 128        # fixed by the module: Linear(nb_item*2, 128)
BATCH = 8           # small-batch demo
BATCH_TILE = 128    # rows per grid step in the batched path (fills MXU height)


def dis_kernel(cond_ref, pred_ref, w1c_ref, w1p_ref, b1_ref, w2_ref, b2_ref,
               o_ref):
    # Layer 1: torch.cat folded into a split matmul. Activations are cast to
    # bf16 (VPU) so both MXU operands are bf16 -> native MXU rate, f32 acc.
    cond = cond_ref[...].astype(jnp.bfloat16)
    pred = pred_ref[...].astype(jnp.bfloat16)
    h = (jnp.dot(cond, w1c_ref[...], preferred_element_type=jnp.float32)
         + jnp.dot(pred, w1p_ref[...], preferred_element_type=jnp.float32)
         + b1_ref[...])
    h = jnp.maximum(h, 0.0)
    # Layer 2 + sigmoid: (B,128)@(128,1) is a wasteful MXU shape, so do a VPU
    # multiply against the (1,128) w2 row and reduce across lanes on the XLU.
    z = jnp.sum(h * w2_ref[...], axis=-1, keepdims=True) + b2_ref[0, 0]
    # NOTE: last output dim of 1 lowers to a masked store; it's a single tiny
    # store here, acceptable (don't copy this layout into wide variants).
    o_ref[...] = jax.nn.sigmoid(z).astype(o_ref.dtype)


def dis_forward(condition, predict, params):
    """condition, predict: (B, nb_item) float32. Returns (B, 1) float32."""
    B, N = condition.shape
    w1c, w1p = params["w1c"], params["w1p"]              # (N, H) bf16 each
    b1, w2_row, b2 = params["b1"], params["w2_row"], params["b2"]
    H = w1c.shape[1]

    flops = 2 * B * (2 * N * H) + 2 * B * H
    bytes_accessed = (4 * 2 * B * N      # f32 activations in
                      + 2 * 2 * N * H    # bf16 W1 halves
                      + 4 * H + 4 * H + 4  # b1, w2 row, b2
                      + 4 * B)           # output
    cost = pl.CostEstimate(flops=flops, transcendentals=B,
                           bytes_accessed=bytes_accessed)
    out_shape = jax.ShapeDtypeStruct((B, 1), jnp.float32)

    if B >= BATCH_TILE and B % BATCH_TILE == 0:
        # Batched path: tile rows; weights use a constant block index (no
        # re-DMA across steps); parallel axis lets v7x use both TensorCores.
        tb = BATCH_TILE
        return pl.pallas_call(
            dis_kernel,
            out_shape=out_shape,
            grid=(B // tb,),
            in_specs=[
                pl.BlockSpec((tb, N), lambda i: (i, 0)),
                pl.BlockSpec((tb, N), lambda i: (i, 0)),
                pl.BlockSpec((N, H), lambda i: (0, 0)),
                pl.BlockSpec((N, H), lambda i: (0, 0)),
                pl.BlockSpec((1, H), lambda i: (0, 0)),
                pl.BlockSpec((1, H), lambda i: (0, 0)),
                pl.BlockSpec((1, 1), lambda i: (0, 0),
                             memory_space=pltpu.MemorySpace.SMEM),
            ],
            out_specs=pl.BlockSpec((tb, 1), lambda i: (i, 0)),
            compiler_params=pltpu.CompilerParams(
                dimension_semantics=("parallel",)),
            cost_estimate=cost,
        )(condition, predict, w1c, w1p, b1, w2_row, b2)

    # Small-batch path: whole problem (<200 KiB) is VMEM-resident in ONE
    # invocation -> no per-grid-step pipeline overhead.
    vmem = pl.BlockSpec(memory_space=pltpu.MemorySpace.VMEM)
    smem = pl.BlockSpec(memory_space=pltpu.MemorySpace.SMEM)
    return pl.pallas_call(
        dis_kernel,
        out_shape=out_shape,
        in_specs=[vmem, vmem, vmem, vmem, vmem, vmem, smem],
        out_specs=vmem,
        cost_estimate=cost,
    )(condition, predict, w1c, w1p, b1, w2_row, b2)


def init_params(key, nb_item, hidden):
    # PyTorch-like uniform(-1/sqrt(fan_in), 1/sqrt(fan_in)) init.
    ks = jax.random.split(key, 4)
    fan1 = 2 * nb_item
    bound1 = 1.0 / jnp.sqrt(fan1)
    w1 = jax.random.uniform(ks[0], (fan1, hidden), jnp.float32, -bound1, bound1)
    b1 = jax.random.uniform(ks[1], (1, hidden), jnp.float32, -bound1, bound1)
    bound2 = 1.0 / jnp.sqrt(hidden)
    w2 = jax.random.uniform(ks[2], (hidden, 1), jnp.float32, -bound2, bound2)
    b2 = jax.random.uniform(ks[3], (1, 1), jnp.float32, -bound2, bound2)
    return dict(
        # Pre-split W1 (so the kernel never builds the concatenated input),
        # transposed to (in, out), stored bf16 (intentional accuracy tradeoff
        # documented in the perf review).
        w1c=w1[:nb_item].astype(jnp.bfloat16),
        w1p=w1[nb_item:].astype(jnp.bfloat16),
        b1=b1,                 # (1, H) f32
        w2_row=w2.T,           # (1, H) f32 lane-dense row for the VPU path
        b2=b2,                 # (1, 1) f32 scalar (lives in SMEM)
    )


def dis_reference(condition, predict, p):
    # Pure-JAX reference matching the kernel's bf16-weight numerics
    # (exact bf16 products, f32 accumulation).
    cond = condition.astype(jnp.bfloat16).astype(jnp.float32)
    pred = predict.astype(jnp.bfloat16).astype(jnp.float32)
    data = jnp.concatenate([cond, pred], axis=-1)
    w1 = jnp.concatenate([p["w1c"], p["w1p"]], axis=0).astype(jnp.float32)
    h = jnp.maximum(
        jnp.dot(data, w1, precision=jax.lax.Precision.HIGHEST) + p["b1"], 0.0)
    z = jnp.sum(h * p["w2_row"], axis=-1, keepdims=True) + p["b2"][0, 0]
    return jax.nn.sigmoid(z)


if __name__ == "__main__":
    key = jax.random.PRNGKey(0)
    kc, kp, kw = jax.random.split(key, 3)
    params = init_params(kw, NB_ITEM, HIDDEN)

    # condition: binary-ish purchase vector; predict: generator output in [0,1].
    condition = (jax.random.uniform(kc, (BATCH, NB_ITEM)) < 0.1).astype(jnp.float32)
    predict = jax.random.uniform(kp, (BATCH, NB_ITEM), jnp.float32)

    # Small-batch (gridless, fully VMEM-resident) path.
    out = jax.block_until_ready(jax.jit(dis_forward)(condition, predict, params))
    ref = dis_reference(condition, predict, params)
    assert out.shape == (BATCH, 1)
    assert jnp.allclose(out, ref, atol=2e-4, rtol=2e-4)

    # Larger-batch (batch-tiled, parallel-grid) path — the amortization lever
    # recommended by the perf review.
    big_b = 2 * BATCH_TILE
    kc2, kp2 = jax.random.split(jax.random.PRNGKey(1), 2)
    cond_big = (jax.random.uniform(kc2, (big_b, NB_ITEM)) < 0.1).astype(jnp.float32)
    pred_big = jax.random.uniform(kp2, (big_b, NB_ITEM), jnp.float32)
    out_big = jax.block_until_ready(jax.jit(dis_forward)(cond_big, pred_big, params))
    ref_big = dis_reference(cond_big, pred_big, params)
    assert out_big.shape == (big_b, 1)
    assert jnp.allclose(out_big, ref_big, atol=2e-4, rtol=2e-4)

    print("KERNEL_OK")
</pallas_src>

<mosaic_0001>
module attributes {stable_mosaic.version = 11 : i64} {
  func.func @dis_kernel(%arg0: memref<8x128xf32, #tpu.memory_space<vmem>>, %arg1: memref<8x128xf32, #tpu.memory_space<vmem>>, %arg2: memref<128x128xbf16, #tpu.memory_space<vmem>>, %arg3: memref<128x128xbf16, #tpu.memory_space<vmem>>, %arg4: memref<1x128xf32, #tpu.memory_space<vmem>>, %arg5: memref<1x128xf32, #tpu.memory_space<vmem>>, %arg6: memref<1x1xf32, #tpu.memory_space<smem>>, %arg7: memref<8x1xf32, #tpu.memory_space<vmem>>) attributes {dimension_semantics = [], scalar_prefetch = 0 : i64, scratch_operands = 0 : i64, tpu.core_type = #tpu.core_type<tc>} {
    %c0 = arith.constant 0 : index
    %c0_0 = arith.constant 0 : index
    %0 = vector.load %arg0[%c0, %c0_0] : memref<8x128xf32, #tpu.memory_space<vmem>>, vector<8x128xf32>
    %1 = arith.truncf %0 : vector<8x128xf32> to vector<8x128xbf16>
    %c0_1 = arith.constant 0 : index
    %c0_2 = arith.constant 0 : index
    %2 = vector.load %arg1[%c0_1, %c0_2] : memref<8x128xf32, #tpu.memory_space<vmem>>, vector<8x128xf32>
    %3 = arith.truncf %2 : vector<8x128xf32> to vector<8x128xbf16>
    %c0_3 = arith.constant 0 : index
    %c0_4 = arith.constant 0 : index
    %4 = vector.load %arg2[%c0_3, %c0_4] : memref<128x128xbf16, #tpu.memory_space<vmem>>, vector<128x128xbf16>
    %cst = arith.constant dense<0.000000e+00> : vector<8x128xf32>
    %5 = tpu.matmul %1, %4, %cst {dimension_numbers = #tpu.dot_dimension_numbers<[1], [0], [0], [1], [0, 0, 1, 1], [], []>} : vector<8x128xbf16>, vector<128x128xbf16>, vector<8x128xf32> -> vector<8x128xf32>
    %c0_5 = arith.constant 0 : index
    %c0_6 = arith.constant 0 : index
    %6 = vector.load %arg3[%c0_5, %c0_6] : memref<128x128xbf16, #tpu.memory_space<vmem>>, vector<128x128xbf16>
    %cst_7 = arith.constant dense<0.000000e+00> : vector<8x128xf32>
    %7 = tpu.matmul %3, %6, %cst_7 {dimension_numbers = #tpu.dot_dimension_numbers<[1], [0], [0], [1], [0, 0, 1, 1], [], []>} : vector<8x128xbf16>, vector<128x128xbf16>, vector<8x128xf32> -> vector<8x128xf32>
    %8 = arith.addf %5, %7 : vector<8x128xf32>
    %c0_8 = arith.constant 0 : index
    %c0_9 = arith.constant 0 : index
    %9 = vector.load %arg4[%c0_8, %c0_9] : memref<1x128xf32, #tpu.memory_space<vmem>>, vector<1x128xf32>
    %10 = vector.broadcast %9 : vector<1x128xf32> to vector<8x128xf32>
    %11 = arith.addf %8, %10 : vector<8x128xf32>
    %cst_10 = arith.constant 0.000000e+00 : f32
    %12 = vector.broadcast %cst_10 : f32 to vector<8x128xf32>
    %13 = arith.maximumf %11, %12 : vector<8x128xf32>
    %c0_11 = arith.constant 0 : index
    %c0_12 = arith.constant 0 : index
    %14 = vector.load %arg5[%c0_11, %c0_12] : memref<1x128xf32, #tpu.memory_space<vmem>>, vector<1x128xf32>
    %15 = vector.broadcast %14 : vector<1x128xf32> to vector<8x128xf32>
    %16 = arith.mulf %13, %15 : vector<8x128xf32>
    %cst_13 = arith.constant dense<0.000000e+00> : vector<8xf32>
    %17 = vector.multi_reduction <add>, %16, %cst_13 [1] : vector<8x128xf32> to vector<8xf32>
    %18 = vector.shape_cast %17 : vector<8xf32> to vector<8x1xf32>
    %c0_14 = arith.constant 0 : index
    %c0_15 = arith.constant 0 : index
    %19 = memref.load %arg6[%c0_14, %c0_15] : memref<1x1xf32, #tpu.memory_space<smem>>
    %20 = vector.broadcast %19 : f32 to vector<8x1xf32>
    %21 = arith.addf %18, %20 : vector<8x1xf32>
    %22 = arith.negf %21 : vector<8x1xf32>
    %23 = math.exp %22 : vector<8x1xf32>
    %cst_16 = arith.constant 1.000000e+00 : f32
    %24 = vector.broadcast %cst_16 : f32 to vector<8x1xf32>
    %25 = arith.addf %24, %23 : vector<8x1xf32>
    %26 = arith.divf %24, %25 : vector<8x1xf32>
    %c0_17 = arith.constant 0 : index
    %c0_18 = arith.constant 0 : index
    %27 = vector.load %arg7[%c0_17, %c0_18] : memref<8x1xf32, #tpu.memory_space<vmem>>, vector<8x1xf32>
    tpu.vector_store %arg7[%c0_17, %c0_18], %26 {strides = array<i32>} : memref<8x1xf32, #tpu.memory_space<vmem>>, vector<8x1xf32>,
    return
  }
}

</mosaic_0001>

<llo_original>
// kernel: dis_forward.1
$region0: #{dis_forward.1}
  #allocation0 [shape = 'u32[]', space=smem, size = 0x4, offset = 0x4, fixed_abs, tag = 'smem constant byte address 0x4 - core index']
  #allocation1 [shape = 'u32[144,128]{1,0:T(1,128)}', space=vmem, size = 0x12000, scoped, tag = 'internal scratch']
  #allocation2 [shape = 'f32[1,1]{1,0:T(1,128)S(6)}', space=smem, size = 0x200, scoped, tag = 'scoped memory for dis_forward.1']
  %s0 = inlined_call_operand.hbm [shape: f32[8,128], index: 0, kind: input, shape index: {}]
  %s1 = inlined_call_operand.hbm [shape: f32[8,128], index: 1, kind: input, shape index: {}]
  %s2 = inlined_call_operand.hbm [shape: bf16[128,128], index: 2, kind: input, shape index: {}]
  %s3 = inlined_call_operand.hbm [shape: bf16[128,128], index: 3, kind: input, shape index: {}]
  %s4 = inlined_call_operand.vmem [shape: f32[1,128], index: 4, kind: input, shape index: {}]
  %s5 = inlined_call_operand.vmem [shape: f32[1,128], index: 5, kind: input, shape index: {}]
  %s6 = inlined_call_operand.<no memory space> [shape: f32[1,1], index: 6, kind: input, shape index: {}]
  %s7 = inlined_call_operand.vmem [shape: f32[8,1], index: 7, kind: output, shape index: {}]
  %s8 = sld [smem:[#allocation0]]
  $region54: #{dis_forward.1} parent=0
    _
  %s10 = ssub.s32 1, %s8
  %s11 = scalar_select 0, %s10, %s8
  %12 = sst [smem:[#allocation2]] %s6
  $region1: #{dis_forward.1} parent=0
    #allocation3 [shape = 'u8[4096]{0}', space=vmem, size = 0x1000, scoped, tag = 'input window, operand 0, single buffered']
    #allocation4 [shape = 's32[1]{0}', space=sflag, size = 0x4, scoped, tag = 'scoped memory for dis_forward.1']
    #allocation5 [shape = 'u8[4096]{0}', space=vmem, size = 0x1000, scoped, tag = 'input window, operand 1, single buffered']
    #allocation6 [shape = 's32[1]{0}', space=sflag, size = 0x4, scoped, tag = 'scoped memory for dis_forward.1']
    #allocation7 [shape = 'u8[32768]{0}', space=vmem, size = 0x8000, scoped, tag = 'input window, operand 2, single buffered']
    #allocation8 [shape = 'u8[32768]{0}', space=vmem, size = 0x8000, scoped, tag = 'input window, operand 3, single buffered']
    #allocation9 [shape = 's32[1]{0}', space=sflag, size = 0x4, scoped, tag = 'scoped memory for dis_forward.1']
    %13 = vsyncpa [#allocation4], 0
    %14 = vsyncpa [#allocation6], 0
    %15 = vsyncpa [#allocation9], 0
    // Predicated region
    $region2: #{dis_forward.1} parent=1 // pred_check
      _
    $region3: #{dis_forward.1} parent=1 // pred_check_branch
      %17 = sbr.rel (0) target = $region5
    $region4: #{dis_forward.1} parent=1 // pred_region
      %s19 = ssub.s32 128, 128
      %20 = vsyncadd [#allocation4], %s19
      %s22 = sshll.u32 [#allocation3], 4
      %s23 = int_to_ptr.vmem [resolvable:$true] %s22
      %25 = dma.hbm_to_vmem [thread:$0]  %s0, 128, %s23, [#allocation4]
    $region5: #{dis_forward.1} parent=1 // pred_fallthru
      _
    // Predicated region
    $region6: #{dis_forward.1} parent=1 // pred_check
      _
    $region7: #{dis_forward.1} parent=1 // pred_check_branch
      %27 = sbr.rel (0) target = $region9
    $region8: #{dis_forward.1} parent=1 // pred_region
      %s29 = ssub.s32 128, 128
      %30 = vsyncadd [#allocation6], %s29
      %s32 = sshll.u32 [#allocation5], 4
      %s33 = int_to_ptr.vmem [resolvable:$true] %s32
      %35 = dma.hbm_to_vmem [thread:$0]  %s1, 128, %s33, [#allocation6]
    $region9: #{dis_forward.1} parent=1 // pred_fallthru
      _
    // Predicated region
    $region10: #{dis_forward.1} parent=1 // pred_check
      _
    $region11: #{dis_forward.1} parent=1 // pred_check_branch
      %37 = sbr.rel (0) target = $region13
    $region12: #{dis_forward.1} parent=1 // pred_region
      %s39 = ssub.s32 1024, 1024
      %40 = vsyncadd [#allocation6], %s39
      %s41 = sshll.u32 [#allocation7], 4
      %s42 = int_to_ptr.vmem [resolvable:$true] %s41
      %47 = dma.hbm_to_vmem [thread:$0]  %s2, 1024, %s42, [#allocation6], 64, 64, 4
    $region13: #{dis_forward.1} parent=1 // pred_fallthru
      _
    // Predicated region
    $region14: #{dis_forward.1} parent=1 // pred_check
      _
    $region15: #{dis_forward.1} parent=1 // pred_check_branch
      %49 = sbr.rel (0) target = $region17
    $region16: #{dis_forward.1} parent=1 // pred_region
      %s51 = ssub.s32 1024, 1024
      %52 = vsyncadd [#allocation9], %s51
      %s53 = sshll.u32 [#allocation8], 4
      %s54 = int_to_ptr.vmem [resolvable:$true] %s53
      %59 = dma.hbm_to_vmem [thread:$0]  %s3, 1024, %s54, [#allocation9], 64, 64, 4
    $region17: #{dis_forward.1} parent=1 // pred_fallthru
      _
    // Predicated region
    $region18: #{dis_forward.1} parent=1 // pred_check
      _
    $region19: #{dis_forward.1} parent=1 // pred_check_branch
      %61 = sbr.rel (0) target = $region21
    $region20: #{dis_forward.1} parent=1 // pred_region
      _
    $region21: #{dis_forward.1} parent=1 // pred_fallthru
      _
    // Predicated region
    $region22: #{dis_forward.1} parent=1 // pred_check
      _
    $region23: #{dis_forward.1} parent=1 // pred_check_branch
      %63 = sbr.rel (0) target = $region25
    $region24: #{dis_forward.1} parent=1 // pred_region
      _
    $region25: #{dis_forward.1} parent=1 // pred_fallthru
      _
    // Predicated region
    $region26: #{dis_forward.1} parent=1 // pred_check
      _
    $region27: #{dis_forward.1} parent=1 // pred_check_branch
      %65 = sbr.rel (0) target = $region29
    $region28: #{dis_forward.1} parent=1 // pred_region
      _
    $region29: #{dis_forward.1} parent=1 // pred_fallthru
      _
    // Predicated region
    $region30: #{dis_forward.1} parent=1 // pred_check
      _
    $region31: #{dis_forward.1} parent=1 // pred_check_branch
      %67 = sbr.rel (0) target = $region33
    $region32: #{dis_forward.1} parent=1 // pred_region
      %68 = dma.done [#allocation4], 128
    $region33: #{dis_forward.1} parent=1 // pred_fallthru
      _
    // Predicated region
    $region34: #{dis_forward.1} parent=1 // pred_check
      _
    $region35: #{dis_forward.1} parent=1 // pred_check_branch
      %70 = sbr.rel (0) target = $region37
    $region36: #{dis_forward.1} parent=1 // pred_region
      %71 = dma.done [#allocation6], 128
    $region37: #{dis_forward.1} parent=1 // pred_fallthru
      _
    // Predicated region
    $region38: #{dis_forward.1} parent=1 // pred_check
      _
    $region39: #{dis_forward.1} parent=1 // pred_check_branch
      %73 = sbr.rel (0) target = $region41
    $region40: #{dis_forward.1} parent=1 // pred_region
      %74 = dma.done [#allocation6], 1024
    $region41: #{dis_forward.1} parent=1 // pred_fallthru
      _
    // Predicated region
    $region42: #{dis_forward.1} parent=1 // pred_check
      _
    $region43: #{dis_forward.1} parent=1 // pred_check_branch
      %76 = sbr.rel (0) target = $region45
    $region44: #{dis_forward.1} parent=1 // pred_region
      %77 = dma.done [#allocation9], 1024
    $region45: #{dis_forward.1} parent=1 // pred_fallthru
      _
    %v79 = vld [vmem:[#allocation3] sm:$0xff]
    %v80 = vpack.c.bf16 %v79, %v79
    %v81 = vld [vmem:[#allocation5] sm:$0xff]
    %v82 = vpack.c.bf16 %v81, %v81
    %v83 = vld [vmem:[#allocation7] sm:$0xf]
    %v84 = vld [vmem:[#allocation7 + $0x4] sm:$0xf]
    %v85 = vld [vmem:[#allocation7 + $0x8] sm:$0xf]
    %v86 = vld [vmem:[#allocation7 + $0xc] sm:$0xf]
    %v87 = vld [vmem:[#allocation7 + $0x10] sm:$0xf]
    %v88 = vld [vmem:[#allocation7 + $0x14] sm:$0xf]
    %v89 = vld [vmem:[#allocation7 + $0x18] sm:$0xf]
    %v90 = vld [vmem:[#allocation7 + $0x1c] sm:$0xf]
    %v91 = vld [vmem:[#allocation7 + $0x20] sm:$0xf]
    %v92 = vld [vmem:[#allocation7 + $0x24] sm:$0xf]
    %v93 = vld [vmem:[#allocation7 + $0x28] sm:$0xf]
    %v94 = vld [vmem:[#allocation7 + $0x2c] sm:$0xf]
    %v95 = vld [vmem:[#allocation7 + $0x30] sm:$0xf]
    %v96 = vld [vmem:[#allocation7 + $0x34] sm:$0xf]
    %v97 = vld [vmem:[#allocation7 + $0x38] sm:$0xf]
    %v98 = vld [vmem:[#allocation7 + $0x3c] sm:$0xf]
    %v99 = vld [vmem:[#allocation8] sm:$0xf]
    %v100 = vld [vmem:[#allocation8 + $0x4] sm:$0xf]
    %v101 = vld [vmem:[#allocation8 + $0x8] sm:$0xf]
    %v102 = vld [vmem:[#allocation8 + $0xc] sm:$0xf]
    %v103 = vld [vmem:[#allocation8 + $0x10] sm:$0xf]
    %v104 = vld [vmem:[#allocation8 + $0x14] sm:$0xf]
    %v105 = vld [vmem:[#allocation8 + $0x18] sm:$0xf]
    %v106 = vld [vmem:[#allocation8 + $0x1c] sm:$0xf]
    %v107 = vld [vmem:[#allocation8 + $0x20] sm:$0xf]
    %v108 = vld [vmem:[#allocation8 + $0x24] sm:$0xf]
    %v109 = vld [vmem:[#allocation8 + $0x28] sm:$0xf]
    %v110 = vld [vmem:[#allocation8 + $0x2c] sm:$0xf]
    %v111 = vld [vmem:[#allocation8 + $0x30] sm:$0xf]
    %v112 = vld [vmem:[#allocation8 + $0x34] sm:$0xf]
    %v113 = vld [vmem:[#allocation8 + $0x38] sm:$0xf]
    %v114 = vld [vmem:[#allocation8 + $0x3c] sm:$0xf]
    %v131 = vunpack.c.l.b16 %v99
    %v132 = vunpack.c.l.b16 %v100
    %v133 = vunpack.c.l.b16 %v101
    %v134 = vunpack.c.l.b16 %v102
    %v135 = vunpack.c.l.b16 %v103
    %v136 = vunpack.c.l.b16 %v104
    %v137 = vunpack.c.l.b16 %v105
    %v138 = vunpack.c.l.b16 %v106
    %v139 = vunpack.c.l.b16 %v107
    %v140 = vunpack.c.l.b16 %v108
    %v141 = vunpack.c.l.b16 %v109
    %v142 = vunpack.c.l.b16 %v110
    %v143 = vunpack.c.l.b16 %v111
    %v144 = vunpack.c.l.b16 %v112
    %v145 = vunpack.c.l.b16 %v113
    %v146 = vunpack.c.l.b16 %v114
    %v147 = vpack.c.b16 %v132, %v131
    %v148 = vpack.c.b16 %v134, %v133
    %v149 = vpack.c.b16 %v136, %v135
    %v150 = vpack.c.b16 %v138, %v137
    %v151 = vpack.c.b16 %v140, %v139
    %v152 = vpack.c.b16 %v142, %v141
    %v153 = vpack.c.b16 %v144, %v143
    %v154 = vpack.c.b16 %v146, %v145
    %163 = vmatprep.subr.bf16.mxu0 0
    %164 = vmatpush1.bf16.msra.mxu0 %v147
    %165 = vmatprep.subr.bf16.mxu0 0
    %166 = vmatpush1.bf16.msra.mxu0 %v148
    %167 = vmatprep.subr.bf16.mxu0 0
    %168 = vmatpush1.bf16.msra.mxu0 %v149
    %169 = vmatprep.subr.bf16.mxu0 0
    %170 = vmatpush1.bf16.msra.mxu0 %v150
    %171 = vmatprep.subr.bf16.mxu0 0
    %172 = vmatpush1.bf16.msra.mxu0 %v151
    %173 = vmatprep.subr.bf16.mxu0 0
    %174 = vmatpush1.bf16.msra.mxu0 %v152
    %175 = vmatprep.subr.bf16.mxu0 0
    %176 = vmatpush1.bf16.msra.mxu0 %v153
    %177 = vmatprep.subr.bf16.mxu0 0
    %178 = vmatpush1.bf16.msra.mxu0 %v154
    %179 = vmatprep.subr.bf16.mxu0 0
    %180 = vmatpush1.bf16.msra.mxu0 0
    %181 = vmatprep.subr.bf16.mxu0 0
    %182 = vmatpush1.bf16.msra.mxu0 0
    %183 = vmatprep.subr.bf16.mxu0 0
    %184 = vmatpush1.bf16.msra.mxu0 0
    %185 = vmatprep.subr.bf16.mxu0 0
    %186 = vmatpush1.bf16.msra.mxu0 0
    %187 = vmatprep.subr.bf16.mxu0 0
    %188 = vmatpush1.bf16.msra.mxu0 0
    %189 = vmatprep.subr.bf16.mxu0 0
    %190 = vmatpush1.bf16.msra.mxu0 0
    %191 = vmatprep.subr.bf16.mxu0 0
    %192 = vmatpush1.bf16.msra.mxu0 0
    %193 = vmatprep.subr.bf16.mxu0 0
    %194 = vmatpush1.bf16.msra.mxu0 0
    %195 = vmatprep.mubr.bf16.mxu0 0
    %196 = vmatmul.mubr.bf16.gmra.mrb[0].mxu0 %v82
    %v197 = vpop.f32.mrb[0].mxu0
    %v198 = vadd.f32 0.0, %v197
    %v199 = vpop.f32.mrb[0].mxu0
    %v200 = vpop.f32.mrb[0].mxu0
    %v201 = vpop.f32.mrb[0].mxu0
    %202 = vdwg.mxu0
    %v219 = vunpack.c.l.b16 %v83
    %v220 = vunpack.c.l.b16 %v84
    %v221 = vunpack.c.l.b16 %v85
    %v222 = vunpack.c.l.b16 %v86
    %v223 = vunpack.c.l.b16 %v87
    %v224 = vunpack.c.l.b16 %v88
    %v225 = vunpack.c.l.b16 %v89
    %v226 = vunpack.c.l.b16 %v90
    %v227 = vunpack.c.l.b16 %v91
    %v228 = vunpack.c.l.b16 %v92
    %v229 = vunpack.c.l.b16 %v93
    %v230 = vunpack.c.l.b16 %v94
    %v231 = vunpack.c.l.b16 %v95
    %v232 = vunpack.c.l.b16 %v96
    %v233 = vunpack.c.l.b16 %v97
    %v234 = vunpack.c.l.b16 %v98
    %v235 = vpack.c.b16 %v220, %v219
    %v236 = vpack.c.b16 %v222, %v221
    %v237 = vpack.c.b16 %v224, %v223
    %v238 = vpack.c.b16 %v226, %v225
    %v239 = vpack.c.b16 %v228, %v227
    %v240 = vpack.c.b16 %v230, %v229
    %v241 = vpack.c.b16 %v232, %v231
    %v242 = vpack.c.b16 %v234, %v233
    %251 = vmatprep.subr.bf16.mxu0 0
    %252 = vmatpush1.bf16.msra.mxu0 %v235
    %253 = vmatprep.subr.bf16.mxu0 0
    %254 = vmatpush1.bf16.msra.mxu0 %v236
    %255 = vmatprep.subr.bf16.mxu0 0
    %256 = vmatpush1.bf16.msra.mxu0 %v237
    %257 = vmatprep.subr.bf16.mxu0 0
    %258 = vmatpush1.bf16.msra.mxu0 %v238
    %259 = vmatprep.subr.bf16.mxu0 0
    %260 = vmatpush1.bf16.msra.mxu0 %v239
    %261 = vmatprep.subr.bf16.mxu0 0
    %262 = vmatpush1.bf16.msra.mxu0 %v240
    %263 = vmatprep.subr.bf16.mxu0 0
    %264 = vmatpush1.bf16.msra.mxu0 %v241
    %265 = vmatprep.subr.bf16.mxu0 0
    %266 = vmatpush1.bf16.msra.mxu0 %v242
    %267 = vmatprep.subr.bf16.mxu0 0
    %268 = vmatpush1.bf16.msra.mxu0 0
    %269 = vmatprep.subr.bf16.mxu0 0
    %270 = vmatpush1.bf16.msra.mxu0 0
    %271 = vmatprep.subr.bf16.mxu0 0
    %272 = vmatpush1.bf16.msra.mxu0 0
    %273 = vmatprep.subr.bf16.mxu0 0
    %274 = vmatpush1.bf16.msra.mxu0 0
    %275 = vmatprep.subr.bf16.mxu0 0
    %276 = vmatpush1.bf16.msra.mxu0 0
    %277 = vmatprep.subr.bf16.mxu0 0
    %278 = vmatpush1.bf16.msra.mxu0 0
    %279 = vmatprep.subr.bf16.mxu0 0
    %280 = vmatpush1.bf16.msra.mxu0 0
    %281 = vmatprep.subr.bf16.mxu0 0
    %282 = vmatpush1.bf16.msra.mxu0 0
    %283 = vmatprep.mubr.bf16.mxu0 0
    %284 = vmatmul.mubr.bf16.gmra.mrb[0].mxu0 %v80
    %v285 = vpop.f32.mrb[0].mxu0
    %v286 = vadd.f32 %v198, %v285
    %v287 = vpop.f32.mrb[0].mxu0
    %v288 = vpop.f32.mrb[0].mxu0
    %v289 = vpop.f32.mrb[0].mxu0
    %290 = vdwg.mxu0
    %v291 = vld [vmem:[%s4] sm:$0x1]
    %v293 = vlaneseq
    %v294 = vshrl.u32 %v293, 7
    %v295 = vsub.s32 0, %v294
    %v296 = vrot.slane %v291, %v295
    %v298 = vadd.f32 %v286, %v296
    %v299 = vmax.f32 %v298, 0.0
    %v300 = vld [vmem:[%s5] sm:$0x1]
    %v302 = vlaneseq
    %v303 = vshrl.u32 %v302, 7
    %v304 = vsub.s32 0, %v303
    %v305 = vrot.slane %v300, %v304
    %v307 = vmul.f32 %v299, %v305
    %308 = vadd.xlane.f32.xlu0 %v307
    %v309 = vpop.xlane.xlu0 %308
    %s310 = sld [smem:[#allocation2]]
    %v311 = vstv %s310
    %v312 = vadd.f32 %v309, %v311
    %v313 = vxor.u32 %v312, 2147483648
    %v314 = vmul.f32 %v313, 1.442695
    %v315 = vpow.pop %v314
    %v316 = vadd.f32 %v315, 1.0
    %v317 = vrcp.pop %v316
    %v318 = vmul.f32 1.0, %v317
    %vm319 = vcmask 7168
    %320 = vst.msk [vmem:[%s7] sm:$0xff] %vm319, %v318
    // Predicated region
    $region46: #{dis_forward.1} parent=1 // pred_check
      _
    $region47: #{dis_forward.1} parent=1 // pred_check_branch
      %322 = sbr.rel (0) target = $region49
    $region48: #{dis_forward.1} parent=1 // pred_region
      _
    $region49: #{dis_forward.1} parent=1 // pred_fallthru
      _
    // Predicated region
    $region50: #{dis_forward.1} parent=1 // pred_check
      _
    $region51: #{dis_forward.1} parent=1 // pred_check_branch
      %324 = sbr.rel (0) target = $region53
    $region52: #{dis_forward.1} parent=1 // pred_region
      _
    $region53: #{dis_forward.1} parent=1 // pred_fallthru
      _
    %325 = vsyncpa [#allocation4], 1
    %326 = vsyncpa [#allocation6], 1
    %327 = vsyncpa [#allocation9], 1

</llo_original>
